<compile_context>
chip_gen: v7x
topology: tpu7x:2x2x1
jax: 0.10.0
libtpu: 0.0.40
codegen_flags: <defaults>
</compile_context>

<pallas_src>
import jax
import jax.numpy as jnp
from jax.experimental import pallas as pl
from jax.experimental.pallas import tpu as pltpu

# ---------------- model hyper-parameters (small, consistent with the module) ---
B = 2            # batch
N = 8            # num_nodes (radars)
F = 32           # in_channels
C = 32           # out_channels per head
HEADS = 2        # attention heads
HC = HEADS * C   # concat output width (64)
BF = B * F       # batch packed along lanes for the input transform (64)
BHC = B * HC     # batch packed along lanes everywhere else (128 -> one full vreg)
EDGE_DIM = 1     # edge attribute dim
NEG_SLOPE = 0.2  # GATv2 default LeakyReLU slope

# constant-slab row layout (all sections start on 8-row sublane boundaries)
ROW_BL = 0                    # row 0: lin_l bias (tiled over batch lanes)
ROW_OB = 1                    # row 1: output bias (tiled over batch lanes)
ROW_EVW = 8                   # rows  8..71 : ev[i,j]*W_e + br  (edge term, br folded in)
ROW_MASK = ROW_EVW + N * N    # rows 72..135: additive softmax mask (0 / -1e30)
ROW_ATT = ROW_MASK + N * N    # rows 136..263: block-diagonal attention matrix [BHC, BHC]
SLAB_ROWS = ROW_ATT + BHC     # 264


# ------------------------------- Pallas kernel ---------------------------------
def gatv2_kernel(x_ref, w_ref, slab_ref, o_ref):
    """x_ref   : (N, B*F)        node features, batch packed along lanes
       w_ref   : (B*F, 2*B*HC)   block-diag fused [lin_l | lin_r] weight
       slab_ref: (SLAB_ROWS, B*HC) packed constants (see row layout above)
       o_ref   : (N, B*HC)       output, one full vreg
    """
    bl_row = slab_ref[ROW_BL:ROW_BL + 1, :]                     # [1, BHC]
    ob_row = slab_ref[ROW_OB:ROW_OB + 1, :]                     # [1, BHC]
    evw = slab_ref[ROW_EVW:ROW_EVW + N * N, :]                  # [N*N, BHC]
    mask = slab_ref[ROW_MASK:ROW_MASK + N * N, :]               # [N*N, BHC]
    att_big = slab_ref[ROW_ATT:ROW_ATT + BHC, :]                # [BHC, BHC]

    # 1) lin_l / lin_r for BOTH samples with one MXU matmul (block-diag weight).
    g = jnp.dot(x_ref[...], w_ref[...], preferred_element_type=jnp.float32)  # [N, 2*BHC]
    gl = g[:, :BHC] + bl_row          # x_l = lin_l(x) + bl   (used in z and as the message)
    gr = g[:, BHC:]                   # x_r = lin_r(x)        (br is folded into evw)

    # 2) GATv2 pre-activation  z[i, j] = x_l[j] + x_r[i] + W_e * e_ij  (+ biases)
    z = (gl[None, :, :] + gr[:, None, :]).reshape(N * N, BHC) + evw
    z = jnp.where(z > 0, z, NEG_SLOPE * z)                       # single LeakyReLU pass

    # 3) per-head logits, broadcast across each head's C lanes by the block att matrix,
    #    with the -1e30 non-edge mask applied BEFORE the softmax max (correctness fix).
    e = jnp.dot(z, att_big, preferred_element_type=jnp.float32) + mask       # [N*N, BHC]

    # 4) masked softmax over source nodes j (each dst i is exactly one sublane group).
    e = e.reshape(N, N, BHC)
    m = jnp.max(e, axis=1, keepdims=True)
    a = jnp.exp(e - m)                                           # masked entries -> exactly 0
    denom = jnp.sum(a, axis=1, keepdims=True)                    # >= 1 (self-loop survives mask)
    alpha = a * pl.reciprocal(denom, approx=True)

    # 5) aggregate messages x_l[j]; one elementwise pass + sublane reduce, one full-vreg store.
    out = jnp.sum(alpha * gl[None, :, :], axis=1) + ob_row       # [N, BHC]
    o_ref[...] = out.astype(o_ref.dtype)


# ------------------------------ wrapper -----------------------------------------
def prepare_params(params, adj, ev):
    """One-time parameter/graph preprocessing (hoisted out of the per-call path)."""
    wl, bl, wr, br, we, att, bias = params

    # Block-diagonal fused weight: g = x_t @ w_big gives [lin_l(b0)|lin_l(b1)|lin_r(b0)|lin_r(b1)].
    eye_b = jnp.eye(B, dtype=jnp.float32)
    w_big = jnp.concatenate([jnp.kron(eye_b, wl), jnp.kron(eye_b, wr)], axis=1)  # [BF, 2*BHC]

    bl_row = jnp.tile(bl[0], B)[None, :]                         # [1, BHC]
    ob_row = jnp.tile(bias[0], B)[None, :]                       # [1, BHC]
    br_row = jnp.tile(br[0], B)
    we_row = jnp.tile(we[0], B)

    # Edge term per (dst i, src j), batch-tiled on lanes, with the lin_r bias folded in.
    evw = ev.reshape(N * N, 1) * we_row[None, :] + br_row[None, :]               # [N*N, BHC]
    # Additive softmax mask (0 on edges, -1e30 elsewhere), applied before the row max.
    mask = jnp.tile(jnp.where(adj > 0, 0.0, -1e30).reshape(N * N, 1), (1, BHC))  # [N*N, BHC]
    # Block-diagonal attention matrix over (batch, head): e column for (b, h) sums only
    # z columns of the same (b, h) block and is replicated across that head's C lanes.
    grp = jnp.arange(BHC) // C
    att_big = jnp.where(grp[:, None] == grp[None, :],
                        jnp.tile(att.reshape(HC), B)[:, None], 0.0)              # [BHC, BHC]

    pad = jnp.zeros((ROW_EVW - 2, BHC), jnp.float32)
    slab = jnp.concatenate([bl_row, ob_row, pad, evw, mask, att_big], axis=0)    # [264, BHC]
    assert slab.shape == (SLAB_ROWS, BHC)
    return w_big, slab


@jax.jit
def radar_gat_forward(node_feats, w_big, slab):
    """node_feats: [B, N, F] -> [B, N, HEADS*C]."""
    # Pack the batch along lanes: x_t[n, b*F + f] = node_feats[b, n, f]  (layout plumbing).
    x_t = node_feats.transpose(1, 0, 2).reshape(N, BF)

    out = pl.pallas_call(
        gatv2_kernel,
        out_shape=jax.ShapeDtypeStruct((N, BHC), jnp.float32),
        grid_spec=pltpu.PrefetchScalarGridSpec(
            num_scalar_prefetch=0,
            grid=(1,),                                          # single step on every chip gen
            in_specs=[
                pl.BlockSpec((N, BF), lambda i: (0, 0)),
                pl.BlockSpec((BF, 2 * BHC), lambda i: (0, 0)),
                pl.BlockSpec((SLAB_ROWS, BHC), lambda i: (0, 0)),
            ],
            out_specs=pl.BlockSpec((N, BHC), lambda i: (0, 0)),
        ),
    )(x_t, w_big, slab)

    # Unpack lanes back to [B, N, HC].
    return out.reshape(N, B, HC).transpose(1, 0, 2)


# ------------------------------ JAX glue / reference ----------------------------
def densify_graph(edge_index, edge_attr, num_nodes):
    """Dense adj / edge-value matrices with PyG-style self loops (fill_value='mean').
    Assumes no parallel edges and no pre-existing self loops (the static radar graph
    satisfies this)."""
    # TODO(synk): multi-edges / pre-existing self loops are not representable densely.
    src, dst = edge_index[0], edge_index[1]
    ea = edge_attr[:, 0]
    adj = jnp.zeros((num_nodes, num_nodes), jnp.float32).at[dst, src].set(1.0)
    ev = jnp.zeros((num_nodes, num_nodes), jnp.float32).at[dst, src].set(ea)
    deg = jnp.zeros((num_nodes,), jnp.float32).at[dst].add(1.0)
    ssum = jnp.zeros((num_nodes,), jnp.float32).at[dst].add(ea)
    loop_val = jnp.where(deg > 0, ssum / jnp.maximum(deg, 1.0), 0.0)
    idx = jnp.arange(num_nodes)
    adj = adj.at[idx, idx].set(1.0)
    ev = ev.at[idx, idx].set(loop_val)
    return adj, ev


def reference_forward(node_feats, params, adj, ev):
    wl, bl, wr, br, we, att, bias = params

    def one(x):
        gl = (x @ wl + bl[0]).reshape(N, HEADS, C)
        gr = (x @ wr + br[0]).reshape(N, HEADS, C)
        weh = we[0].reshape(HEADS, C)
        z = gl[None, :, :, :] + gr[:, None, :, :] + ev[:, :, None, None] * weh[None, None]
        z = jnp.where(z > 0, z, NEG_SLOPE * z)
        e = jnp.sum(z * att[None, None], axis=-1)                  # [N, N, H]
        e = jnp.where(adj[:, :, None] > 0, e, -1e30)
        m = jnp.max(e, axis=1, keepdims=True)
        a = jnp.exp(e - m) * adj[:, :, None]
        alpha = a / jnp.sum(a, axis=1, keepdims=True)
        out = jnp.einsum('ijh,jhc->ihc', alpha, gl)                # [N, H, C]
        return out.reshape(N, HC) + bias[0]

    return jax.vmap(one)(node_feats)


def init_params(key):
    ks = jax.random.split(key, 7)
    glorot = lambda k, shape, fan_in: (jax.random.normal(k, shape, jnp.float32)
                                       / jnp.sqrt(jnp.float32(fan_in)))
    wl = glorot(ks[0], (F, HC), F)
    bl = jnp.zeros((1, HC), jnp.float32)
    wr = glorot(ks[1], (F, HC), F)
    br = jnp.zeros((1, HC), jnp.float32)
    we = glorot(ks[2], (EDGE_DIM, HC), EDGE_DIM)                   # lin_edge, no bias
    att = glorot(ks[3], (HEADS, C), C)
    bias = 0.01 * jax.random.normal(ks[4], (1, HC), jnp.float32)
    return wl, bl, wr, br, we, att, bias


if __name__ == "__main__":
    key = jax.random.PRNGKey(0)
    k_x, k_e, k_p = jax.random.split(key, 3)

    # static radar graph: bidirectional ring over N nodes (no self loops)
    nodes = jnp.arange(N)
    src = jnp.concatenate([nodes, nodes])
    dst = jnp.concatenate([(nodes + 1) % N, (nodes - 1) % N])
    edge_index = jnp.stack([src, dst]).astype(jnp.int32)           # [2, E]
    edge_attr = jax.random.uniform(k_e, (2 * N, EDGE_DIM), jnp.float32)

    node_feats = jax.random.normal(k_x, (B, N, F), jnp.float32)    # [B, N, F]
    params = init_params(k_p)
    adj, ev = densify_graph(edge_index, edge_attr, N)

    # one-time parameter / graph preprocessing (hoisted out of the forward path)
    w_big, slab = prepare_params(params, adj, ev)

    out = radar_gat_forward(node_feats, w_big, slab)
    jax.block_until_ready(out)
    assert out.shape == (B, N, HC)

    ref = reference_forward(node_feats, params, adj, ev)
    # tolerance slightly relaxed for pl.reciprocal(approx=True) in the softmax
    assert jnp.allclose(out, ref, rtol=5e-3, atol=1e-3), "mismatch vs JAX reference"

    print("KERNEL_OK")
</pallas_src>

<mosaic_0001>
module attributes {stable_mosaic.version = 11 : i64} {
  func.func @gatv2_kernel(%arg0: i32, %arg1: memref<8x64xf32, #tpu.memory_space<vmem>>, %arg2: memref<64x256xf32, #tpu.memory_space<vmem>>, %arg3: memref<264x128xf32, #tpu.memory_space<vmem>>, %arg4: memref<8x128xf32, #tpu.memory_space<vmem>>) attributes {dimension_semantics = [#tpu.dimension_semantics<arbitrary>], iteration_bounds = array<i64: 1>, scalar_prefetch = 0 : i64, scratch_operands = 0 : i64, tpu.core_type = #tpu.core_type<tc>, window_params = [{pipeline_mode = #tpu.pipeline_mode<synchronous>, transform_indices = @transform_0, window_bounds = array<i64: 8, 64>}, {pipeline_mode = #tpu.pipeline_mode<synchronous>, transform_indices = @transform_1, window_bounds = array<i64: 64, 256>}, {pipeline_mode = #tpu.pipeline_mode<synchronous>, transform_indices = @transform_2, window_bounds = array<i64: 264, 128>}, {pipeline_mode = #tpu.pipeline_mode<synchronous>, transform_indices = @transform_3, window_bounds = array<i64: 8, 128>}]} {
    %c0 = arith.constant 0 : index
    %c0_0 = arith.constant 0 : index
    %0 = vector.load %arg3[%c0, %c0_0] : memref<264x128xf32, #tpu.memory_space<vmem>>, vector<1x128xf32>
    %c1 = arith.constant 1 : index
    %c0_1 = arith.constant 0 : index
    %1 = vector.load %arg3[%c1, %c0_1] : memref<264x128xf32, #tpu.memory_space<vmem>>, vector<1x128xf32>
    %c8 = arith.constant 8 : index
    %c0_2 = arith.constant 0 : index
    %2 = vector.load %arg3[%c8, %c0_2] : memref<264x128xf32, #tpu.memory_space<vmem>>, vector<64x128xf32>
    %c72 = arith.constant 72 : index
    %c0_3 = arith.constant 0 : index
    %3 = vector.load %arg3[%c72, %c0_3] : memref<264x128xf32, #tpu.memory_space<vmem>>, vector<64x128xf32>
    %c136 = arith.constant 136 : index
    %c0_4 = arith.constant 0 : index
    %4 = vector.load %arg3[%c136, %c0_4] : memref<264x128xf32, #tpu.memory_space<vmem>>, vector<128x128xf32>
    %c0_5 = arith.constant 0 : index
    %c0_6 = arith.constant 0 : index
    %5 = vector.load %arg1[%c0_5, %c0_6] : memref<8x64xf32, #tpu.memory_space<vmem>>, vector<8x64xf32>
    %c0_7 = arith.constant 0 : index
    %c0_8 = arith.constant 0 : index
    %6 = vector.load %arg2[%c0_7, %c0_8] : memref<64x256xf32, #tpu.memory_space<vmem>>, vector<64x256xf32>
    %cst = arith.constant dense<0.000000e+00> : vector<8x256xf32>
    %7 = tpu.matmul %5, %6, %cst {dimension_numbers = #tpu.dot_dimension_numbers<[1], [0], [0], [1], [0, 0, 1, 1], [], []>} : vector<8x64xf32>, vector<64x256xf32>, vector<8x256xf32> -> vector<8x256xf32>
    %8 = vector.extract_strided_slice %7 {offsets = [0, 0], sizes = [8, 128], strides = [1, 1]} : vector<8x256xf32> to vector<8x128xf32>
    %9 = vector.broadcast %0 : vector<1x128xf32> to vector<8x128xf32>
    %10 = arith.addf %8, %9 : vector<8x128xf32>
    %11 = vector.extract_strided_slice %7 {offsets = [0, 128], sizes = [8, 128], strides = [1, 1]} : vector<8x256xf32> to vector<8x128xf32>
    %12 = vector.shape_cast %10 : vector<8x128xf32> to vector<1x8x128xf32>
    %13 = vector.shape_cast %11 : vector<8x128xf32> to vector<8x1x128xf32>
    %14 = vector.broadcast %12 : vector<1x8x128xf32> to vector<8x8x128xf32>
    %15 = vector.broadcast %13 : vector<8x1x128xf32> to vector<8x8x128xf32>
    %16 = arith.addf %14, %15 : vector<8x8x128xf32>
    %17 = vector.shape_cast %16 : vector<8x8x128xf32> to vector<64x128xf32>
    %18 = arith.addf %17, %2 : vector<64x128xf32>
    %cst_9 = arith.constant 0.000000e+00 : f32
    %19 = vector.broadcast %cst_9 : f32 to vector<64x128xf32>
    %20 = arith.cmpf ogt, %18, %19 : vector<64x128xf32>
    %cst_10 = arith.constant 2.000000e-01 : f32
    %21 = vector.broadcast %cst_10 : f32 to vector<64x128xf32>
    %22 = arith.mulf %21, %18 : vector<64x128xf32>
    %23 = arith.select %20, %18, %22 : vector<64x128xi1>, vector<64x128xf32>
    %cst_11 = arith.constant dense<0.000000e+00> : vector<64x128xf32>
    %24 = tpu.matmul %23, %4, %cst_11 {dimension_numbers = #tpu.dot_dimension_numbers<[1], [0], [0], [1], [0, 0, 1, 1], [], []>} : vector<64x128xf32>, vector<128x128xf32>, vector<64x128xf32> -> vector<64x128xf32>
    %25 = arith.addf %24, %3 : vector<64x128xf32>
    %26 = vector.shape_cast %25 : vector<64x128xf32> to vector<8x8x128xf32>
    %cst_12 = arith.constant dense<0xFF800000> : vector<8x128xf32>
    %27 = vector.multi_reduction <maximumf>, %26, %cst_12 [1] : vector<8x8x128xf32> to vector<8x128xf32>
    %28 = vector.shape_cast %27 : vector<8x128xf32> to vector<8x1x128xf32>
    %29 = vector.broadcast %28 : vector<8x1x128xf32> to vector<8x8x128xf32>
    %30 = arith.subf %26, %29 : vector<8x8x128xf32>
    %31 = math.exp %30 : vector<8x8x128xf32>
    %cst_13 = arith.constant dense<0.000000e+00> : vector<8x128xf32>
    %32 = vector.multi_reduction <add>, %31, %cst_13 [1] : vector<8x8x128xf32> to vector<8x128xf32>
    %33 = vector.shape_cast %32 : vector<8x128xf32> to vector<8x1x128xf32>
    %34 = tpu.reciprocal %33 {approx = true} : vector<8x1x128xf32> -> vector<8x1x128xf32>
    %35 = vector.broadcast %34 : vector<8x1x128xf32> to vector<8x8x128xf32>
    %36 = arith.mulf %31, %35 : vector<8x8x128xf32>
    %37 = vector.shape_cast %10 : vector<8x128xf32> to vector<1x8x128xf32>
    %38 = vector.broadcast %37 : vector<1x8x128xf32> to vector<8x8x128xf32>
    %39 = arith.mulf %36, %38 : vector<8x8x128xf32>
    %cst_14 = arith.constant dense<0.000000e+00> : vector<8x128xf32>
    %40 = vector.multi_reduction <add>, %39, %cst_14 [1] : vector<8x8x128xf32> to vector<8x128xf32>
    %41 = vector.broadcast %1 : vector<1x128xf32> to vector<8x128xf32>
    %42 = arith.addf %40, %41 : vector<8x128xf32>
    %c0_15 = arith.constant 0 : index
    %c0_16 = arith.constant 0 : index
    %43 = vector.load %arg4[%c0_15, %c0_16] : memref<8x128xf32, #tpu.memory_space<vmem>>, vector<8x128xf32>
    tpu.vector_store %arg4[%c0_15, %c0_16], %42 {strides = array<i32>} : memref<8x128xf32, #tpu.memory_space<vmem>>, vector<8x128xf32>,
    return
  }
  func.func @transform_0(%arg0: i32) -> (i32, i32) {
    %c0_i32 = arith.constant 0 : i32
    %c0_i32_0 = arith.constant 0 : i32
    %c0_i32_1 = arith.constant 0 : i32
    return %c0_i32, %c0_i32_0 : i32, i32
  }
  func.func @transform_1(%arg0: i32) -> (i32, i32) {
    %c0_i32 = arith.constant 0 : i32
    %c0_i32_0 = arith.constant 0 : i32
    %c0_i32_1 = arith.constant 0 : i32
    return %c0_i32, %c0_i32_0 : i32, i32
  }
  func.func @transform_2(%arg0: i32) -> (i32, i32) {
    %c0_i32 = arith.constant 0 : i32
    %c0_i32_0 = arith.constant 0 : i32
    %c0_i32_1 = arith.constant 0 : i32
    return %c0_i32, %c0_i32_0 : i32, i32
  }
  func.func @transform_3(%arg0: i32) -> (i32, i32) {
    %c0_i32 = arith.constant 0 : i32
    %c0_i32_0 = arith.constant 0 : i32
    %c0_i32_1 = arith.constant 0 : i32
    return %c0_i32, %c0_i32_0 : i32, i32
  }
}

</mosaic_0001>

<llo_original>
// kernel: radar_gat_forward.1
$region0: #{radar_gat_forward.1}
  #allocation0 [shape = 'u32[]', space=smem, size = 0x4, offset = 0x4, fixed_abs, tag = 'smem constant byte address 0x4 - core index']
  #allocation1 [shape = 'u32[144,128]{1,0:T(1,128)}', space=vmem, size = 0x12000, scoped, tag = 'internal scratch']
  %s0 = inlined_call_operand.vmem [shape: f32[8,64], index: 0, kind: input, shape index: {}]
  %s1 = inlined_call_operand.hbm [shape: f32[64,256], index: 1, kind: input, shape index: {}]
  %s2 = inlined_call_operand.hbm [shape: f32[264,128], index: 2, kind: input, shape index: {}]
  %s3 = inlined_call_operand.vmem [shape: f32[8,128], index: 3, kind: output, shape index: {}]
  %s4 = sld [smem:[#allocation0]]
  $region30: #{radar_gat_forward.1} parent=0
    _
  %s6 = ssub.s32 1, %s4
  %s7 = scalar_select 0, %s6, %s4
  $region1: #{radar_gat_forward.1} parent=0
    #allocation2 [shape = 'u8[65536]{0}', space=vmem, size = 0x10000, scoped, tag = 'input window, operand 1, single buffered']
    #allocation3 [shape = 's32[1]{0}', space=sflag, size = 0x4, scoped, tag = 'scoped memory for radar_gat_forward.1']
    #allocation4 [shape = 'u8[135168]{0}', space=vmem, size = 0x21000, scoped, tag = 'input window, operand 2, single buffered']
    #allocation5 [shape = 's32[1]{0}', space=sflag, size = 0x4, scoped, tag = 'scoped memory for radar_gat_forward.1']
    %8 = vsyncpa [#allocation3], 0
    %9 = vsyncpa [#allocation5], 0
    // Predicated region
    $region2: #{radar_gat_forward.1} parent=1 // pred_check
      _
    $region3: #{radar_gat_forward.1} parent=1 // pred_check_branch
      %11 = sbr.rel (0) target = $region5
    $region4: #{radar_gat_forward.1} parent=1 // pred_region
      _
    $region5: #{radar_gat_forward.1} parent=1 // pred_fallthru
      _
    // Predicated region
    $region6: #{radar_gat_forward.1} parent=1 // pred_check
      _
    $region7: #{radar_gat_forward.1} parent=1 // pred_check_branch
      %13 = sbr.rel (0) target = $region9
    $region8: #{radar_gat_forward.1} parent=1 // pred_region
      %s15 = ssub.s32 2048, 2048
      %16 = vsyncadd [#allocation3], %s15
      %s17 = sshll.u32 [#allocation2], 4
      %s18 = int_to_ptr.vmem [resolvable:$true] %s17
      %23 = dma.hbm_to_vmem [thread:$0]  %s1, 2048, %s18, [#allocation3], 256, 256, 16
    $region9: #{radar_gat_forward.1} parent=1 // pred_fallthru
      _
    // Predicated region
    $region10: #{radar_gat_forward.1} parent=1 // pred_check
      _
    $region11: #{radar_gat_forward.1} parent=1 // pred_check_branch
      %25 = sbr.rel (0) target = $region13
    $region12: #{radar_gat_forward.1} parent=1 // pred_region
      %s27 = ssub.s32 4224, 4224
      %28 = vsyncadd [#allocation5], %s27
      %s29 = sshll.u32 [#allocation4], 4
      %s30 = int_to_ptr.vmem [resolvable:$true] %s29
      %35 = dma.hbm_to_vmem [thread:$0]  %s2, 4224, %s30, [#allocation5], 128, 128, 8
    $region13: #{radar_gat_forward.1} parent=1 // pred_fallthru
      _
    // Predicated region
    $region14: #{radar_gat_forward.1} parent=1 // pred_check
      _
    $region15: #{radar_gat_forward.1} parent=1 // pred_check_branch
      %37 = sbr.rel (0) target = $region17
    $region16: #{radar_gat_forward.1} parent=1 // pred_region
      %38 = dma.done [#allocation3], 2048
    $region17: #{radar_gat_forward.1} parent=1 // pred_fallthru
      _
    // Predicated region
    $region18: #{radar_gat_forward.1} parent=1 // pred_check
      _
    $region19: #{radar_gat_forward.1} parent=1 // pred_check_branch
      %40 = sbr.rel (0) target = $region21
    $region20: #{radar_gat_forward.1} parent=1 // pred_region
      %41 = dma.done [#allocation5], 4224
    $region21: #{radar_gat_forward.1} parent=1 // pred_fallthru
      _
    %v42 = vld [vmem:[#allocation4] sm:$0x1]
    %v43 = vld [vmem:[#allocation4 + $0x1] sm:$0x1]
    %v44 = vld [vmem:[#allocation4 + $0x8] sm:$0xff]
    %v45 = vld [vmem:[#allocation4 + $0x10] sm:$0xff]
    %v46 = vld [vmem:[#allocation4 + $0x18] sm:$0xff]
    %v47 = vld [vmem:[#allocation4 + $0x20] sm:$0xff]
    %v48 = vld [vmem:[#allocation4 + $0x28] sm:$0xff]
    %v49 = vld [vmem:[#allocation4 + $0x30] sm:$0xff]
    %v50 = vld [vmem:[#allocation4 + $0x38] sm:$0xff]
    %v51 = vld [vmem:[#allocation4 + $0x40] sm:$0xff]
    %v52 = vld [vmem:[#allocation4 + $0x48] sm:$0xff]
    %v53 = vld [vmem:[#allocation4 + $0x50] sm:$0xff]
    %v54 = vld [vmem:[#allocation4 + $0x58] sm:$0xff]
    %v55 = vld [vmem:[#allocation4 + $0x60] sm:$0xff]
    %v56 = vld [vmem:[#allocation4 + $0x68] sm:$0xff]
    %v57 = vld [vmem:[#allocation4 + $0x70] sm:$0xff]
    %v58 = vld [vmem:[#allocation4 + $0x78] sm:$0xff]
    %v59 = vld [vmem:[#allocation4 + $0x80] sm:$0xff]
    %v60 = vld [vmem:[#allocation4 + $0x88] sm:$0xff]
    %v61 = vld [vmem:[#allocation4 + $0x90] sm:$0xff]
    %v62 = vld [vmem:[#allocation4 + $0x98] sm:$0xff]
    %v63 = vld [vmem:[#allocation4 + $0xa0] sm:$0xff]
    %v64 = vld [vmem:[#allocation4 + $0xa8] sm:$0xff]
    %v65 = vld [vmem:[#allocation4 + $0xb0] sm:$0xff]
    %v66 = vld [vmem:[#allocation4 + $0xb8] sm:$0xff]
    %v67 = vld [vmem:[#allocation4 + $0xc0] sm:$0xff]
    %v68 = vld [vmem:[#allocation4 + $0xc8] sm:$0xff]
    %v69 = vld [vmem:[#allocation4 + $0xd0] sm:$0xff]
    %v70 = vld [vmem:[#allocation4 + $0xd8] sm:$0xff]
    %v71 = vld [vmem:[#allocation4 + $0xe0] sm:$0xff]
    %v72 = vld [vmem:[#allocation4 + $0xe8] sm:$0xff]
    %v73 = vld [vmem:[#allocation4 + $0xf0] sm:$0xff]
    %v74 = vld [vmem:[#allocation4 + $0xf8] sm:$0xff]
    %v75 = vld [vmem:[#allocation4 + $0x100] sm:$0xff]
    %v76 = vld [vmem:[%s0] sm:$0xff]
    %v77 = vld [vmem:[#allocation2] sm:$0xff]
    %v78 = vld [vmem:[#allocation2 + $0x8] sm:$0xff]
    %v79 = vld [vmem:[#allocation2 + $0x10] sm:$0xff]
    %v80 = vld [vmem:[#allocation2 + $0x18] sm:$0xff]
    %v81 = vld [vmem:[#allocation2 + $0x20] sm:$0xff]
    %v82 = vld [vmem:[#allocation2 + $0x28] sm:$0xff]
    %v83 = vld [vmem:[#allocation2 + $0x30] sm:$0xff]
    %v84 = vld [vmem:[#allocation2 + $0x38] sm:$0xff]
    %v85 = vld [vmem:[#allocation2 + $0x40] sm:$0xff]
    %v86 = vld [vmem:[#allocation2 + $0x48] sm:$0xff]
    %v87 = vld [vmem:[#allocation2 + $0x50] sm:$0xff]
    %v88 = vld [vmem:[#allocation2 + $0x58] sm:$0xff]
    %v89 = vld [vmem:[#allocation2 + $0x60] sm:$0xff]
    %v90 = vld [vmem:[#allocation2 + $0x68] sm:$0xff]
    %v91 = vld [vmem:[#allocation2 + $0x70] sm:$0xff]
    %v92 = vld [vmem:[#allocation2 + $0x78] sm:$0xff]
    %vm93 = vcmask 523264
    %v95 = vsel %vm93, %v76, 0
    %97 = vmatprep.subr.mxu0 %v78
    %98 = vmatpush1.msra.mxu0 %v77
    %99 = vmatprep.subr.mxu0 %v80
    %100 = vmatpush1.msra.mxu0 %v79
    %101 = vmatprep.subr.mxu0 %v82
    %102 = vmatpush1.msra.mxu0 %v81
    %103 = vmatprep.subr.mxu0 %v84
    %104 = vmatpush1.msra.mxu0 %v83
    %105 = vmatprep.subr.mxu0 %v86
    %106 = vmatpush1.msra.mxu0 %v85
    %107 = vmatprep.subr.mxu0 %v88
    %108 = vmatpush1.msra.mxu0 %v87
    %109 = vmatprep.subr.mxu0 %v90
    %110 = vmatpush1.msra.mxu0 %v89
    %111 = vmatprep.subr.mxu0 %v92
    %112 = vmatpush1.msra.mxu0 %v91
    %113 = vmatprep.subr.mxu0 0.0
    %114 = vmatpush1.msra.mxu0 0.0
    %115 = vmatprep.subr.mxu0 0.0
    %116 = vmatpush1.msra.mxu0 0.0
    %117 = vmatprep.subr.mxu0 0.0
    %118 = vmatpush1.msra.mxu0 0.0
    %119 = vmatprep.subr.mxu0 0.0
    %120 = vmatpush1.msra.mxu0 0.0
    %121 = vmatprep.subr.mxu0 0.0
    %122 = vmatpush1.msra.mxu0 0.0
    %123 = vmatprep.subr.mxu0 0.0
    %124 = vmatpush1.msra.mxu0 0.0
    %125 = vmatprep.subr.mxu0 0.0
    %126 = vmatpush1.msra.mxu0 0.0
    %127 = vmatprep.subr.mxu0 0.0
    %128 = vmatpush1.msra.mxu0 0.0
    %129 = vmatprep.subr.mxu0 0.0
    %130 = vmatpush1.msra.mxu0 0.0
    %131 = vmatprep.subr.mxu0 0.0
    %132 = vmatpush1.msra.mxu0 0.0
    %133 = vmatprep.subr.mxu0 0.0
    %134 = vmatpush1.msra.mxu0 0.0
    %135 = vmatprep.subr.mxu0 0.0
    %136 = vmatpush1.msra.mxu0 0.0
    %137 = vmatprep.subr.mxu0 0.0
    %138 = vmatpush1.msra.mxu0 0.0
    %139 = vmatprep.subr.mxu0 0.0
    %140 = vmatpush1.msra.mxu0 0.0
    %141 = vmatprep.subr.mxu0 0.0
    %142 = vmatpush1.msra.mxu0 0.0
    %143 = vmatprep.subr.mxu0 0.0
    %144 = vmatpush1.msra.mxu0 0.0
    %145 = vmatprep.subr.mxu0 0.0
    %146 = vmatpush1.msra.mxu0 0.0
    %147 = vmatprep.subr.mxu0 0.0
    %148 = vmatpush1.msra.mxu0 0.0
    %149 = vmatprep.subr.mxu0 0.0
    %150 = vmatpush1.msra.mxu0 0.0
    %151 = vmatprep.subr.mxu0 0.0
    %152 = vmatpush1.msra.mxu0 0.0
    %153 = vmatprep.subr.mxu0 0.0
    %154 = vmatpush1.msra.mxu0 0.0
    %155 = vmatprep.subr.mxu0 0.0
    %156 = vmatpush1.msra.mxu0 0.0
    %157 = vmatprep.subr.mxu0 0.0
    %158 = vmatpush1.msra.mxu0 0.0
    %159 = vmatprep.subr.mxu0 0.0
    %160 = vmatpush1.msra.mxu0 0.0
    %161 = vmatprep.mubr.f32.mxu0 0.0
    %162 = vmatmul.mubr.f32.gmra.mrb[0].mxu0 %v95
    %v163 = vpop.f32.mrb[0].mxu0
    %v164 = vadd.f32 0.0, %v163
    %v165 = vpop.f32.mrb[0].mxu0
    %v166 = vadd.f32 0.0, %v165
    %167 = vdwg.mxu0
    %v168 = vlaneseq
    %v169 = vshrl.u32 %v168, 7
    %v170 = vsub.s32 0, %v169
    %v171 = vrot.slane %v42, %v170
    %v172 = vadd.f32 %v164, %v171
    %v174 = vcombine.high %v166, %v166
    %v176 = vunpack.c.l.s4 1966171168
    %v177 = vunpack.c.0.s8 %v176
    %v178 = vlaneseq
    %v179 = vshrl.u32 %v178, 7
    %v180 = vsub.s32 %v177, %v179
    %v181 = vrot.slane %v166, %v180
    %v183 = vunpack.c.l.s4 1966171168
    %v184 = vunpack.c.0.s8 %v183
    %v185 = vlaneseq
    %v186 = vshrl.u32 %v185, 7
    %v187 = vsub.s32 %v184, %v186
    %v188 = vrot.slane %v174, %v187
    %v189 = vcombine.high %v181, %v181
    %v190 = vcombine.high %v188, %v188
    %v192 = vunpack.c.l.s4 1966171168
    %v193 = vunpack.c.0.s8 %v192
    %v194 = vlaneseq
    %v195 = vshrl.u32 %v194, 7
    %v196 = vsub.s32 %v193, %v195
    %v197 = vrot.slane %v181, %v196
    %v199 = vunpack.c.l.s4 1966171168
    %v200 = vunpack.c.0.s8 %v199
    %v201 = vlaneseq
    %v202 = vshrl.u32 %v201, 7
    %v203 = vsub.s32 %v200, %v202
    %v204 = vrot.slane %v188, %v203
    %v206 = vunpack.c.l.s4 1966171168
    %v207 = vunpack.c.0.s8 %v206
    %v208 = vlaneseq
    %v209 = vshrl.u32 %v208, 7
    %v210 = vsub.s32 %v207, %v209
    %v211 = vrot.slane %v189, %v210
    %v213 = vunpack.c.l.s4 1966171168
    %v214 = vunpack.c.0.s8 %v213
    %v215 = vlaneseq
    %v216 = vshrl.u32 %v215, 7
    %v217 = vsub.s32 %v214, %v216
    %v218 = vrot.slane %v190, %v217
    %v219 = vcombine.high %v197, %v197
    %v220 = vcombine.high %v204, %v204
    %v221 = vcombine.high %v211, %v211
    %v222 = vcombine.high %v218, %v218
    %v223 = vlaneseq
    %v224 = vshrl.u32 %v223, 7
    %v225 = vsub.s32 0, %v224
    %v226 = vrot.slane %v197, %v225
    %v227 = vlaneseq
    %v228 = vshrl.u32 %v227, 7
    %v229 = vsub.s32 0, %v228
    %v230 = vrot.slane %v211, %v229
    %v231 = vlaneseq
    %v232 = vshrl.u32 %v231, 7
    %v233 = vsub.s32 0, %v232
    %v234 = vrot.slane %v219, %v233
    %v235 = vlaneseq
    %v236 = vshrl.u32 %v235, 7
    %v237 = vsub.s32 0, %v236
    %v238 = vrot.slane %v221, %v237
    %v239 = vlaneseq
    %v240 = vshrl.u32 %v239, 7
    %v241 = vsub.s32 0, %v240
    %v242 = vrot.slane %v204, %v241
    %v243 = vlaneseq
    %v244 = vshrl.u32 %v243, 7
    %v245 = vsub.s32 0, %v244
    %v246 = vrot.slane %v218, %v245
    %v247 = vlaneseq
    %v248 = vshrl.u32 %v247, 7
    %v249 = vsub.s32 0, %v248
    %v250 = vrot.slane %v220, %v249
    %v251 = vlaneseq
    %v252 = vshrl.u32 %v251, 7
    %v253 = vsub.s32 0, %v252
    %v254 = vrot.slane %v222, %v253
    %v263 = vadd.f32 %v172, %v226
    %v264 = vadd.f32 %v172, %v230
    %v265 = vadd.f32 %v172, %v234
    %v266 = vadd.f32 %v172, %v238
    %v267 = vadd.f32 %v172, %v242
    %v268 = vadd.f32 %v172, %v246
    %v269 = vadd.f32 %v172, %v250
    %v270 = vadd.f32 %v172, %v254
    %v271 = vadd.f32 %v263, %v44
    %v272 = vadd.f32 %v264, %v45
    %v273 = vadd.f32 %v265, %v46
    %v274 = vadd.f32 %v266, %v47
    %v275 = vadd.f32 %v267, %v48
    %v276 = vadd.f32 %v268, %v49
    %v277 = vadd.f32 %v269, %v50
    %v278 = vadd.f32 %v270, %v51
    %vm279 = vcmp.gt.f32.partialorder %v271, 0.0
    %vm280 = vcmp.gt.f32.partialorder %v272, 0.0
    %vm281 = vcmp.gt.f32.partialorder %v273, 0.0
    %vm282 = vcmp.gt.f32.partialorder %v274, 0.0
    %vm283 = vcmp.gt.f32.partialorder %v275, 0.0
    %vm284 = vcmp.gt.f32.partialorder %v276, 0.0
    %vm285 = vcmp.gt.f32.partialorder %v277, 0.0
    %vm286 = vcmp.gt.f32.partialorder %v278, 0.0
    %v287 = vmul.f32 %v271, 0.2
    %v288 = vmul.f32 %v272, 0.2
    %v289 = vmul.f32 %v273, 0.2
    %v290 = vmul.f32 %v274, 0.2
    %v291 = vmul.f32 %v275, 0.2
    %v292 = vmul.f32 %v276, 0.2
    %v293 = vmul.f32 %v277, 0.2
    %v294 = vmul.f32 %v278, 0.2
    %v295 = vsel %vm279, %v271, %v287
    %v296 = vsel %vm280, %v272, %v288
    %v297 = vsel %vm281, %v273, %v289
    %v298 = vsel %vm282, %v274, %v290
    %v299 = vsel %vm283, %v275, %v291
    %v300 = vsel %vm284, %v276, %v292
    %v301 = vsel %vm285, %v277, %v293
    %v302 = vsel %vm286, %v278, %v294
    %303 = vmatprep.subr.mxu0 0.0
    %304 = vmatpush1.msra.mxu0 %v60
    %305 = vmatprep.subr.mxu0 0.0
    %306 = vmatpush1.msra.mxu0 %v61
    %307 = vmatprep.subr.mxu0 0.0
    %308 = vmatpush1.msra.mxu0 %v62
    %309 = vmatprep.subr.mxu0 0.0
    %310 = vmatpush1.msra.mxu0 %v63
    %311 = vmatprep.subr.mxu0 0.0
    %312 = vmatpush1.msra.mxu0 %v64
    %313 = vmatprep.subr.mxu0 0.0
    %314 = vmatpush1.msra.mxu0 %v65
    %315 = vmatprep.subr.mxu0 0.0
    %316 = vmatpush1.msra.mxu0 %v66
    %317 = vmatprep.subr.mxu0 0.0
    %318 = vmatpush1.msra.mxu0 %v67
    %319 = vmatprep.subr.mxu0 0.0
    %320 = vmatpush1.msra.mxu0 %v68
    %321 = vmatprep.subr.mxu0 0.0
    %322 = vmatpush1.msra.mxu0 %v69
    %323 = vmatprep.subr.mxu0 0.0
    %324 = vmatpush1.msra.mxu0 %v70
    %325 = vmatprep.subr.mxu0 0.0
    %326 = vmatpush1.msra.mxu0 %v71
    %327 = vmatprep.subr.mxu0 0.0
    %328 = vmatpush1.msra.mxu0 %v72
    %329 = vmatprep.subr.mxu0 0.0
    %330 = vmatpush1.msra.mxu0 %v73
    %331 = vmatprep.subr.mxu0 0.0
    %332 = vmatpush1.msra.mxu0 %v74
    %333 = vmatprep.subr.mxu0 0.0
    %334 = vmatpush1.msra.mxu0 %v75
    %335 = vmatprep.subr.mxu0 0.0
    %336 = vmatpush1.msra.mxu0 0.0
    %337 = vmatprep.subr.mxu0 0.0
    %338 = vmatpush1.msra.mxu0 0.0
    %339 = vmatprep.subr.mxu0 0.0
    %340 = vmatpush1.msra.mxu0 0.0
    %341 = vmatprep.subr.mxu0 0.0
    %342 = vmatpush1.msra.mxu0 0.0
    %343 = vmatprep.subr.mxu0 0.0
    %344 = vmatpush1.msra.mxu0 0.0
    %345 = vmatprep.subr.mxu0 0.0
    %346 = vmatpush1.msra.mxu0 0.0
    %347 = vmatprep.subr.mxu0 0.0
    %348 = vmatpush1.msra.mxu0 0.0
    %349 = vmatprep.subr.mxu0 0.0
    %350 = vmatpush1.msra.mxu0 0.0
    %351 = vmatprep.subr.mxu0 0.0
    %352 = vmatpush1.msra.mxu0 0.0
    %353 = vmatprep.subr.mxu0 0.0
    %354 = vmatpush1.msra.mxu0 0.0
    %355 = vmatprep.subr.mxu0 0.0
    %356 = vmatpush1.msra.mxu0 0.0
    %357 = vmatprep.subr.mxu0 0.0
    %358 = vmatpush1.msra.mxu0 0.0
    %359 = vmatprep.subr.mxu0 0.0
    %360 = vmatpush1.msra.mxu0 0.0
    %361 = vmatprep.subr.mxu0 0.0
    %362 = vmatpush1.msra.mxu0 0.0
    %363 = vmatprep.subr.mxu0 0.0
    %364 = vmatpush1.msra.mxu0 0.0
    %365 = vmatprep.subr.mxu0 0.0
    %366 = vmatpush1.msra.mxu0 0.0
    %367 = vmatprep.mubr.f32.mxu0 0.0
    %368 = vmatmul.mubr.f32.gmra.mrb[0].mxu0 %v295
    %v369 = vpop.f32.mrb[0].mxu0
    %v370 = vadd.f32 %v52, %v369
    %v371 = vpop.f32.mrb[0].mxu0
    %372 = vmatprep.mubr.f32.mxu0 0.0
    %373 = vmatmul.mubr.f32.gmra.mrb[0].mxu0 %v296
    %v374 = vpop.f32.mrb[0].mxu0
    %v375 = vadd.f32 %v53, %v374
    %v376 = vpop.f32.mrb[0].mxu0
    %377 = vmatprep.mubr.f32.mxu0 0.0
    %378 = vmatmul.mubr.f32.gmra.mrb[0].mxu0 %v297
    %v379 = vpop.f32.mrb[0].mxu0
    %v380 = vadd.f32 %v54, %v379
    %v381 = vpop.f32.mrb[0].mxu0
    %382 = vmatprep.mubr.f32.mxu0 0.0
    %383 = vmatmul.mubr.f32.gmra.mrb[0].mxu0 %v298
    %v384 = vpop.f32.mrb[0].mxu0
    %v385 = vadd.f32 %v55, %v384
    %v386 = vpop.f32.mrb[0].mxu0
    %387 = vmatprep.mubr.f32.mxu0 0.0
    %388 = vmatmul.mubr.f32.gmra.mrb[0].mxu0 %v299
    %v389 = vpop.f32.mrb[0].mxu0
    %v390 = vadd.f32 %v56, %v389
    %v391 = vpop.f32.mrb[0].mxu0
    %392 = vmatprep.mubr.f32.mxu0 0.0
    %393 = vmatmul.mubr.f32.gmra.mrb[0].mxu0 %v300
    %v394 = vpop.f32.mrb[0].mxu0
    %v395 = vadd.f32 %v57, %v394
    %v396 = vpop.f32.mrb[0].mxu0
    %397 = vmatprep.mubr.f32.mxu0 0.0
    %398 = vmatmul.mubr.f32.gmra.mrb[0].mxu0 %v301
    %v399 = vpop.f32.mrb[0].mxu0
    %v400 = vadd.f32 %v58, %v399
    %v401 = vpop.f32.mrb[0].mxu0
    %402 = vmatprep.mubr.f32.mxu0 0.0
    %403 = vmatmul.mubr.f32.gmra.mrb[0].mxu0 %v302
    %v404 = vpop.f32.mrb[0].mxu0
    %v405 = vadd.f32 %v59, %v404
    %v406 = vpop.f32.mrb[0].mxu0
    %407 = vdwg.mxu0
    %v408 = vrot.slane %v370, 4
    %v409 = vmax.f32 %v370, %v408
    %v410 = vrot.slane %v409, 2
    %v411 = vmax.f32 %v409, %v410
    %v412 = vrot.slane %v411, 1
    %v413 = vmax.f32 %v411, %v412
    %v414 = vrot.slane %v375, 4
    %v415 = vmax.f32 %v375, %v414
    %v416 = vrot.slane %v415, 2
    %v417 = vmax.f32 %v415, %v416
    %v418 = vrot.slane %v417, 1
    %v419 = vmax.f32 %v417, %v418
    %v420 = vrot.slane %v380, 4
    %v421 = vmax.f32 %v380, %v420
    %v422 = vrot.slane %v421, 2
    %v423 = vmax.f32 %v421, %v422
    %v424 = vrot.slane %v423, 1
    %v425 = vmax.f32 %v423, %v424
    %v426 = vrot.slane %v385, 4
    %v427 = vmax.f32 %v385, %v426
    %v428 = vrot.slane %v427, 2
    %v429 = vmax.f32 %v427, %v428
    %v430 = vrot.slane %v429, 1
    %v431 = vmax.f32 %v429, %v430
    %v432 = vrot.slane %v390, 4
    %v433 = vmax.f32 %v390, %v432
    %v434 = vrot.slane %v433, 2
    %v435 = vmax.f32 %v433, %v434
    %v436 = vrot.slane %v435, 1
    %v437 = vmax.f32 %v435, %v436
    %v438 = vrot.slane %v395, 4
    %v439 = vmax.f32 %v395, %v438
    %v440 = vrot.slane %v439, 2
    %v441 = vmax.f32 %v439, %v440
    %v442 = vrot.slane %v441, 1
    %v443 = vmax.f32 %v441, %v442
    %v444 = vrot.slane %v400, 4
    %v445 = vmax.f32 %v400, %v444
    %v446 = vrot.slane %v445, 2
    %v447 = vmax.f32 %v445, %v446
    %v448 = vrot.slane %v447, 1
    %v449 = vmax.f32 %v447, %v448
    %v450 = vrot.slane %v405, 4
    %v451 = vmax.f32 %v405, %v450
    %v452 = vrot.slane %v451, 2
    %v453 = vmax.f32 %v451, %v452
    %v454 = vrot.slane %v453, 1
    %v455 = vmax.f32 %v453, %v454
    %v456 = vsub.f32 %v370, %v413
    %v457 = vsub.f32 %v375, %v419
    %v458 = vsub.f32 %v380, %v425
    %v459 = vsub.f32 %v385, %v431
    %v460 = vsub.f32 %v390, %v437
    %v461 = vsub.f32 %v395, %v443
    %v462 = vsub.f32 %v400, %v449
    %v463 = vsub.f32 %v405, %v455
    %v464 = vmul.f32 %v456, 1.442695
    %v465 = vpow.pop %v464
    %v466 = vmul.f32 %v457, 1.442695
    %v467 = vpow.pop %v466
    %v468 = vmul.f32 %v458, 1.442695
    %v469 = vpow.pop %v468
    %v470 = vmul.f32 %v459, 1.442695
    %v471 = vpow.pop %v470
    %v472 = vmul.f32 %v460, 1.442695
    %v473 = vpow.pop %v472
    %v474 = vmul.f32 %v461, 1.442695
    %v475 = vpow.pop %v474
    %v476 = vmul.f32 %v462, 1.442695
    %v477 = vpow.pop %v476
    %v478 = vmul.f32 %v463, 1.442695
    %v479 = vpow.pop %v478
    %v480 = vrot.slane %v465, 4
    %v481 = vadd.f32 %v465, %v480
    %v482 = vrot.slane %v481, 2
    %v483 = vadd.f32 %v481, %v482
    %v484 = vrot.slane %v483, 1
    %v485 = vadd.f32 %v483, %v484
    %v486 = vrot.slane %v467, 4
    %v487 = vadd.f32 %v467, %v486
    %v488 = vrot.slane %v487, 2
    %v489 = vadd.f32 %v487, %v488
    %v490 = vrot.slane %v489, 1
    %v491 = vadd.f32 %v489, %v490
    %v492 = vrot.slane %v469, 4
    %v493 = vadd.f32 %v469, %v492
    %v494 = vrot.slane %v493, 2
    %v495 = vadd.f32 %v493, %v494
    %v496 = vrot.slane %v495, 1
    %v497 = vadd.f32 %v495, %v496
    %v498 = vrot.slane %v471, 4
    %v499 = vadd.f32 %v471, %v498
    %v500 = vrot.slane %v499, 2
    %v501 = vadd.f32 %v499, %v500
    %v502 = vrot.slane %v501, 1
    %v503 = vadd.f32 %v501, %v502
    %v504 = vrot.slane %v473, 4
    %v505 = vadd.f32 %v473, %v504
    %v506 = vrot.slane %v505, 2
    %v507 = vadd.f32 %v505, %v506
    %v508 = vrot.slane %v507, 1
    %v509 = vadd.f32 %v507, %v508
    %v510 = vrot.slane %v475, 4
    %v511 = vadd.f32 %v475, %v510
    %v512 = vrot.slane %v511, 2
    %v513 = vadd.f32 %v511, %v512
    %v514 = vrot.slane %v513, 1
    %v515 = vadd.f32 %v513, %v514
    %v516 = vrot.slane %v477, 4
    %v517 = vadd.f32 %v477, %v516
    %v518 = vrot.slane %v517, 2
    %v519 = vadd.f32 %v517, %v518
    %v520 = vrot.slane %v519, 1
    %v521 = vadd.f32 %v519, %v520
    %v522 = vrot.slane %v479, 4
    %v523 = vadd.f32 %v479, %v522
    %v524 = vrot.slane %v523, 2
    %v525 = vadd.f32 %v523, %v524
    %v526 = vrot.slane %v525, 1
    %v527 = vadd.f32 %v525, %v526
    %v528 = vrcp.pop %v485
    %v529 = vrcp.pop %v491
    %v530 = vrcp.pop %v497
    %v531 = vrcp.pop %v503
    %v532 = vrcp.pop %v509
    %v533 = vrcp.pop %v515
    %v534 = vrcp.pop %v521
    %v535 = vrcp.pop %v527
    %v536 = vmul.f32 %v465, %v528
    %v537 = vmul.f32 %v467, %v529
    %v538 = vmul.f32 %v469, %v530
    %v539 = vmul.f32 %v471, %v531
    %v540 = vmul.f32 %v473, %v532
    %v541 = vmul.f32 %v475, %v533
    %v542 = vmul.f32 %v477, %v534
    %v543 = vmul.f32 %v479, %v535
    %v544 = vmul.f32 %v536, %v172
    %v545 = vmul.f32 %v537, %v172
    %v546 = vmul.f32 %v538, %v172
    %v547 = vmul.f32 %v539, %v172
    %v548 = vmul.f32 %v540, %v172
    %v549 = vmul.f32 %v541, %v172
    %v550 = vmul.f32 %v542, %v172
    %v551 = vmul.f32 %v543, %v172
    %v552 = vrot.slane %v544, 4
    %v553 = vadd.f32 %v544, %v552
    %v554 = vrot.slane %v553, 2
    %v555 = vadd.f32 %v553, %v554
    %v556 = vrot.slane %v555, 1
    %v557 = vadd.f32 %v555, %v556
    %v558 = vrot.slane %v545, 4
    %v559 = vadd.f32 %v545, %v558
    %v560 = vrot.slane %v559, 2
    %v561 = vadd.f32 %v559, %v560
    %v562 = vrot.slane %v561, 1
    %v563 = vadd.f32 %v561, %v562
    %v564 = vrot.slane %v546, 4
    %v565 = vadd.f32 %v546, %v564
    %v566 = vrot.slane %v565, 2
    %v567 = vadd.f32 %v565, %v566
    %v568 = vrot.slane %v567, 1
    %v569 = vadd.f32 %v567, %v568
    %v570 = vrot.slane %v547, 4
    %v571 = vadd.f32 %v547, %v570
    %v572 = vrot.slane %v571, 2
    %v573 = vadd.f32 %v571, %v572
    %v574 = vrot.slane %v573, 1
    %v575 = vadd.f32 %v573, %v574
    %v576 = vrot.slane %v548, 4
    %v577 = vadd.f32 %v548, %v576
    %v578 = vrot.slane %v577, 2
    %v579 = vadd.f32 %v577, %v578
    %v580 = vrot.slane %v579, 1
    %v581 = vadd.f32 %v579, %v580
    %v582 = vrot.slane %v549, 4
    %v583 = vadd.f32 %v549, %v582
    %v584 = vrot.slane %v583, 2
    %v585 = vadd.f32 %v583, %v584
    %v586 = vrot.slane %v585, 1
    %v587 = vadd.f32 %v585, %v586
    %v588 = vrot.slane %v550, 4
    %v589 = vadd.f32 %v550, %v588
    %v590 = vrot.slane %v589, 2
    %v591 = vadd.f32 %v589, %v590
    %v592 = vrot.slane %v591, 1
    %v593 = vadd.f32 %v591, %v592
    %v594 = vrot.slane %v551, 4
    %v595 = vadd.f32 %v551, %v594
    %v596 = vrot.slane %v595, 2
    %v597 = vadd.f32 %v595, %v596
    %v598 = vrot.slane %v597, 1
    %v599 = vadd.f32 %v597, %v598
    %v600 = vlaneseq
    %v601 = vshrl.u32 %v600, 7
    %v602 = vsub.s32 0, %v601
    %v603 = vrot.slane %v43, %v602
    %v604 = vadd.f32 %v557, %v603
    %v605 = vadd.f32 %v563, %v603
    %v606 = vadd.f32 %v569, %v603
    %v607 = vadd.f32 %v575, %v603
    %v608 = vadd.f32 %v581, %v603
    %v609 = vadd.f32 %v587, %v603
    %v610 = vadd.f32 %v593, %v603
    %v611 = vadd.f32 %v599, %v603
    %v620 = vrot.slane %v605, 7
    %vm621 = vcmask 1041409
    %v622 = vsel %vm621, %v620, %v604
    %v623 = vrot.slane %v606, 6
    %vm624 = vcmask 1042434
    %v625 = vsel %vm624, %v623, %v622
    %v626 = vrot.slane %v607, 5
    %vm627 = vcmask 1043459
    %v628 = vsel %vm627, %v626, %v625
    %v629 = vrot.slane %v608, 4
    %vm630 = vcmask 1044484
    %v631 = vsel %vm630, %v629, %v628
    %v632 = vrot.slane %v609, 3
    %vm633 = vcmask 1045509
    %v634 = vsel %vm633, %v632, %v631
    %v635 = vrot.slane %v610, 2
    %vm636 = vcmask 1046534
    %v637 = vsel %vm636, %v635, %v634
    %v638 = vrot.slane %v611, 1
    %vm639 = vcmask 1047559
    %v640 = vsel %vm639, %v638, %v637
    %642 = vst [vmem:[%s3] sm:$0xff] %v640
    // Predicated region
    $region22: #{radar_gat_forward.1} parent=1 // pred_check
      _
    $region23: #{radar_gat_forward.1} parent=1 // pred_check_branch
      %644 = sbr.rel (0) target = $region25
    $region24: #{radar_gat_forward.1} parent=1 // pred_region
      _
    $region25: #{radar_gat_forward.1} parent=1 // pred_fallthru
      _
    // Predicated region
    $region26: #{radar_gat_forward.1} parent=1 // pred_check
      _
    $region27: #{radar_gat_forward.1} parent=1 // pred_check_branch
      %646 = sbr.rel (0) target = $region29
    $region28: #{radar_gat_forward.1} parent=1 // pred_region
      _
    $region29: #{radar_gat_forward.1} parent=1 // pred_fallthru
      _
    %647 = vsyncpa [#allocation3], 1
    %648 = vsyncpa [#allocation5], 1

</llo_original>
